<compile_context>
chip_gen: v7x
topology: tpu7x:2x2x1
jax: 0.10.0
libtpu: 0.0.40
codegen_flags: <defaults>
</compile_context>

<pallas_src>
import jax
import jax.numpy as jnp
from jax import lax
from jax.experimental import pallas as pl
from jax.experimental.pallas import tpu as pltpu


def rnn_head_kernel(lensm1_ref, u_ref, w_hh_ref, w1_ref, b1_ref, w2_ref, b2_ref,
                    out_ref):
    """Lane-packed RNN recurrence + MLP head for one packed-batch tile.

    P batch rows share one 128-lane vreg row (P = 128 // H), so every VPU/EUP op
    runs on full vregs and each matmul contracts over 128 lanes against a
    block-diagonal weight matrix.

    lensm1_ref : (pb, P*H)    int32  (lens-1), pre-broadcast to full lane width
    u_ref      : (T, pb, P*H) f32    pre-projected inputs U[t] = emb[x[t]]@W_ih+b
    w_hh_ref   : (P*H, P*H)   bf16   block-diagonal hidden->hidden weights
    w1_ref     : (P*H, P*H)   bf16   block-diagonal head linear 1
    b1_ref     : (1, P*H)     f32    head bias 1 (tiled P times)
    w2_ref     : (P*H, P*OP)  bf16   block-diagonal head linear 2 (lane-padded)
    b2_ref     : (1, P*OP)    f32    head bias 2 (tiled, lane-padded)
    out_ref    : (pb, P*OP)   f32    packed logits (lane-dense store)
    """
    T = u_ref.shape[0]
    pb, HP = u_ref.shape[1], u_ref.shape[2]

    # Hoisted out of the loop: full-lane-width lens operand and the recurrent
    # weights are loaded exactly once (no per-step broadcast_in_dim).
    lens_m1 = lensm1_ref[...]                       # (pb, HP) int32
    w_hh = w_hh_ref[...]                            # (HP, HP) bf16

    h0 = jnp.zeros((pb, HP), jnp.float32)           # hidden=None -> zeros
    last0 = jnp.zeros((pb, HP), jnp.float32)

    def step(t, carry):
        h, last = carry
        # Only h @ W_hh sits on the serial dependence chain; U[t] is a plain
        # VMEM load.  f32 hidden state, bf16 weights, f32 accumulation.
        h_new = jnp.tanh(
            u_ref[t]
            + jnp.dot(h.astype(w_hh.dtype), w_hh,
                      preferred_element_type=jnp.float32))
        # Capture h at t == lens-1 (== pack/pad + gather in PyTorch); pure
        # full-vreg VPU compare+select.
        last = jnp.where(lens_m1 == t, h_new, last)
        return (h_new, last)

    # T is static and small -> fully unroll so adjacent steps' MXU push/pop and
    # tanh (EUP) overlap.
    _, last = lax.fori_loop(0, T, step, (h0, last0), unroll=True)
    # TODO(synk): hold W_hh resident in the MXU across the unrolled loop via
    # pltpu.matmul_push_rhs / matmul_acc_lhs / matmul_pop to drop T-1 weight
    # pushes from the vector-extended slot (single-digit % on the serial chain).

    # MLP head (stays in the packed layout -> no in-kernel relayout):
    # Linear -> ReLU -> Dropout(identity at eval) -> Linear.
    w1 = w1_ref[...]
    z = jnp.maximum(
        jnp.dot(last.astype(w1.dtype), w1, preferred_element_type=jnp.float32)
        + b1_ref[...], 0.0)
    w2 = w2_ref[...]
    out_ref[...] = (jnp.dot(z.astype(w2.dtype), w2,
                            preferred_element_type=jnp.float32)
                    + b2_ref[...])                  # lane-dense packed store


def _block_diag(w, p):
    """(R, C) -> (p*R, p*C) block-diagonal matrix holding p copies of w."""
    R, C = w.shape
    out = jnp.zeros((p * R, p * C), w.dtype)
    for j in range(p):
        out = out.at[j * R:(j + 1) * R, j * C:(j + 1) * C].set(w)
    return out


def _pick_packed_block(PB, T, HP):
    """Packed-batch tile size: as large as fits, >=2 tiles when possible."""
    if PB % 8 != 0:
        return PB                       # toy / odd batch: one full-extent tile
    # pb=32 packed rows == 128 batch rows per grid step; amortizes the ~0.35us
    # fixed per-step overhead while keeping vreg pressure low (h/last/h_new/u[t]
    # ~= 16 vregs at pb=32 thanks to lane packing).
    pb = 32
    # Keep the double-buffered U block comfortably inside v7x's 64 MiB VMEM.
    while pb > 8 and 2 * T * pb * HP * 4 > (12 << 20):
        pb -= 8
    if PB >= 2 * pb:
        pass                            # already >=2 tiles for v7x megacore
    elif PB >= 16:
        pb = max(8, (PB // 2) // 8 * 8)  # force >=2 tiles when batch allows
    pb = max(pb, 8)
    while PB % pb:
        pb -= 8
    return pb


def make_params(size_in, size_hidden, size_out, key):
    """Deterministic parameter init mimicking PyTorch shapes/scales."""
    ks = jax.random.split(key, 9)
    H, O, V = size_hidden, size_out, size_in
    s = 1.0 / jnp.sqrt(H)
    u = lambda k, shape, scale: jax.random.uniform(
        k, shape, jnp.float32, -scale, scale)
    return dict(
        embedding=jax.random.normal(ks[0], (V, H), jnp.float32),  # N(0,1) like nn.Embedding
        w_ih=u(ks[1], (H, H), s),      # transposed weight_ih_l0
        w_hh=u(ks[2], (H, H), s),      # transposed weight_hh_l0
        b_rnn=u(ks[3], (1, H), s) + u(ks[4], (1, H), s),          # b_ih + b_hh
        w1=u(ks[5], (H, H), s),
        b1=u(ks[6], (1, H), s),
        w2=u(ks[7], (H, O), s),
        b2=u(ks[8], (1, O), s),
    )


def rnn_forward(x_ids, lens, params):
    """x_ids: (B, T) int32 token ids; lens: (B,) int32 valid lengths."""
    emb = params["embedding"]
    B, T = x_ids.shape
    H = emb.shape[1]
    O = params["w2"].shape[1]

    # Lane packing: P batch rows share one 128-lane vreg row (H=32 -> P=4).
    P = 128 // H if (H <= 128 and 128 % H == 0) else 1
    HP = P * H
    OP = pl.cdiv(O, 128) * 128                      # lane-dense padded logits
    OPP = P * OP

    B_pad = -(-B // P) * P                          # pad batch to a multiple of P
    PB = B_pad // P                                 # packed-batch rows

    # Defensive clamp: PyTorch pack_padded_sequence requires 1 <= len <= T and
    # would raise on invalid lens; we clamp instead (documented behavior delta).
    lens_c = jnp.clip(lens.astype(jnp.int32), 1, T)
    lens_pad = jnp.ones((B_pad,), jnp.int32).at[:B].set(lens_c)
    x_pad = jnp.zeros((B_pad, T), jnp.int32).at[:B, :].set(x_ids.astype(jnp.int32))

    # --- Input projection hoisted out of the recurrence ----------------------
    # emb[x] @ W_ih + b == (emb @ W_ih + b)[x]  (row-select commutes with the
    # matmul): project the tiny (V,H) table once, gather time-major, and pack P
    # batch rows per lane row (contiguous reshape, free).
    proj_tbl = (jnp.dot(emb, params["w_ih"],
                        preferred_element_type=jnp.float32)
                + params["b_rnn"])                  # (V, H)
    u_packed = jnp.take(proj_tbl, x_pad.T, axis=0).reshape(T, PB, HP)
    # TODO(synk): for very large B*T, move this gather in-kernel (VMEM-resident
    # projected table + per-step jnp.take) to avoid the (T,B,H) HBM slab.

    # Full-lane-width (lens - 1) operand: hoists the per-step broadcast out of
    # the unrolled loop and avoids a 1->128 lane-padded VMEM block for lens.
    lensm1_packed = jnp.broadcast_to(
        (lens_pad - 1).reshape(PB, P, 1), (PB, P, H)).reshape(PB, HP)

    # Block-diagonal weights (P copies of each HxH / HxOP block) so every matmul
    # contracts over the full 128 lanes.  bf16 weights, f32 accumulation.
    w_hh_blk = _block_diag(params["w_hh"], P).astype(jnp.bfloat16)   # (HP, HP)
    w1_blk = _block_diag(params["w1"], P).astype(jnp.bfloat16)       # (HP, HP)
    b1_tile = jnp.tile(params["b1"], (1, P))                         # (1, HP)
    w2_padded = jnp.zeros((H, OP), jnp.float32).at[:, :O].set(params["w2"])
    w2_blk = _block_diag(w2_padded, P).astype(jnp.bfloat16)          # (HP, OPP)
    b2_padded = jnp.zeros((1, OP), jnp.float32).at[:, :O].set(params["b2"])
    b2_tile = jnp.tile(b2_padded, (1, P))                            # (1, OPP)

    pb = _pick_packed_block(PB, T, HP)
    grid = (PB // pb,)

    # Explicit VMEM budget (double-buffered blocks + weights), capped at v7x's
    # 64 MiB physical VMEM; also raises v5e's 16 MiB default scoped limit.
    vmem_bytes = (2 * T * pb * HP * 4            # U double-buffer
                  + 2 * pb * HP * 4              # lens operand
                  + 2 * pb * OPP * 4             # output
                  + 2 * (2 * HP * HP * 2 + HP * OPP * 2 + HP * 4 + OPP * 4))
    vmem_limit = int(min(max(2 * vmem_bytes, 32 << 20), 64 << 20))

    grid_spec = pltpu.PrefetchScalarGridSpec(
        num_scalar_prefetch=0,
        grid=grid,
        in_specs=[
            pl.BlockSpec((pb, HP), lambda i: (i, 0)),        # lens-1 (packed)
            pl.BlockSpec((T, pb, HP), lambda i: (0, i, 0)),  # U (time-major, packed)
            pl.BlockSpec((HP, HP), lambda i: (0, 0)),        # W_hh (block-diag)
            pl.BlockSpec((HP, HP), lambda i: (0, 0)),        # W1   (block-diag)
            pl.BlockSpec((1, HP), lambda i: (0, 0)),         # b1   (tiled)
            pl.BlockSpec((HP, OPP), lambda i: (0, 0)),       # W2   (block-diag, padded)
            pl.BlockSpec((1, OPP), lambda i: (0, 0)),        # b2   (tiled, padded)
        ],
        out_specs=pl.BlockSpec((pb, OPP), lambda i: (i, 0)),
    )
    out_packed = pl.pallas_call(
        rnn_head_kernel,
        out_shape=jax.ShapeDtypeStruct((PB, OPP), jnp.float32),
        grid_spec=grid_spec,
        compiler_params=pltpu.CompilerParams(
            dimension_semantics=("parallel",),      # v7x megacore over batch tiles
            vmem_limit_bytes=vmem_limit),
    )(lensm1_packed, u_packed, w_hh_blk, w1_blk, b1_tile, w2_blk, b2_tile)

    # Unpack: (PB, P*OP) -> (B_pad, OP) is a contiguous reshape; drop padding.
    return out_packed.reshape(B_pad, OP)[:B, :O]


if __name__ == "__main__":
    # Module-consistent small shapes: vocab=57 letters, hidden=32, classes=18.
    SIZE_IN, SIZE_HIDDEN, SIZE_OUT = 57, 32, 18
    B, T = 2, 8

    key = jax.random.PRNGKey(0)
    kp, kx = jax.random.split(key)
    params = make_params(SIZE_IN, SIZE_HIDDEN, SIZE_OUT, kp)

    x_ids = jax.random.randint(kx, (B, T), 0, SIZE_IN, dtype=jnp.int32)
    lens = jnp.array([8, 5], dtype=jnp.int32)   # sorted desc (enforce_sorted=True)

    fwd = jax.jit(rnn_forward)   # fuse the small pre/post ops into one dispatch
    out = fwd(x_ids, lens, params)
    jax.block_until_ready(out)
    assert out.shape == (B, SIZE_OUT)
    assert bool(jnp.all(jnp.isfinite(out)))
    print("KERNEL_OK")
</pallas_src>

<mosaic_0001>
module attributes {stable_mosaic.version = 11 : i64} {
  func.func @rnn_head_kernel(%arg0: i32, %arg1: memref<1x128xi32, #tpu.memory_space<vmem>>, %arg2: memref<8x1x128xf32, #tpu.memory_space<vmem>>, %arg3: memref<128x128xbf16, #tpu.memory_space<vmem>>, %arg4: memref<128x128xbf16, #tpu.memory_space<vmem>>, %arg5: memref<1x128xf32, #tpu.memory_space<vmem>>, %arg6: memref<128x512xbf16, #tpu.memory_space<vmem>>, %arg7: memref<1x512xf32, #tpu.memory_space<vmem>>, %arg8: memref<1x512xf32, #tpu.memory_space<vmem>>) attributes {dimension_semantics = [#tpu.dimension_semantics<parallel>], iteration_bounds = array<i64: 1>, scalar_prefetch = 0 : i64, scratch_operands = 0 : i64, tpu.core_type = #tpu.core_type<tc>, window_params = [{transform_indices = @transform_0, window_bounds = array<i64: 1, 128>}, {transform_indices = @transform_1, window_bounds = array<i64: 8, 1, 128>}, {pipeline_mode = #tpu.pipeline_mode<synchronous>, transform_indices = @transform_2, window_bounds = array<i64: 128, 128>}, {pipeline_mode = #tpu.pipeline_mode<synchronous>, transform_indices = @transform_3, window_bounds = array<i64: 128, 128>}, {pipeline_mode = #tpu.pipeline_mode<synchronous>, transform_indices = @transform_4, window_bounds = array<i64: 1, 128>}, {pipeline_mode = #tpu.pipeline_mode<synchronous>, transform_indices = @transform_5, window_bounds = array<i64: 128, 512>}, {pipeline_mode = #tpu.pipeline_mode<synchronous>, transform_indices = @transform_6, window_bounds = array<i64: 1, 512>}, {transform_indices = @transform_7, window_bounds = array<i64: 1, 512>}]} {
    %c0 = arith.constant 0 : index
    %c0_0 = arith.constant 0 : index
    %0 = vector.load %arg1[%c0, %c0_0] : memref<1x128xi32, #tpu.memory_space<vmem>>, vector<1x128xi32>
    %c0_1 = arith.constant 0 : index
    %c0_2 = arith.constant 0 : index
    %1 = vector.load %arg3[%c0_1, %c0_2] : memref<128x128xbf16, #tpu.memory_space<vmem>>, vector<128x128xbf16>
    %cst = arith.constant 0.000000e+00 : f32
    %2 = vector.broadcast %cst : f32 to vector<1x128xf32>
    %cst_3 = arith.constant 0.000000e+00 : f32
    %3 = vector.broadcast %cst_3 : f32 to vector<1x128xf32>
    %c0_i32 = arith.constant 0 : i32
    %4 = arith.index_cast %c0_i32 : i32 to index
    %c0_4 = arith.constant 0 : index
    %c0_5 = arith.constant 0 : index
    %5 = vector.load %arg2[%4, %c0_4, %c0_5] : memref<8x1x128xf32, #tpu.memory_space<vmem>>, vector<1x1x128xf32>
    %6 = vector.shape_cast %5 : vector<1x1x128xf32> to vector<1x128xf32>
    %7 = arith.truncf %2 : vector<1x128xf32> to vector<1x128xbf16>
    %cst_6 = arith.constant dense<0.000000e+00> : vector<1x128xf32>
    %8 = tpu.matmul %7, %1, %cst_6 {dimension_numbers = #tpu.dot_dimension_numbers<[1], [0], [0], [1], [0, 0, 1, 1], [], []>} : vector<1x128xbf16>, vector<128x128xbf16>, vector<1x128xf32> -> vector<1x128xf32>
    %9 = arith.addf %6, %8 : vector<1x128xf32>
    %10 = math.tanh %9 : vector<1x128xf32>
    %11 = vector.broadcast %c0_i32 : i32 to vector<1x128xi32>
    %12 = arith.cmpi eq, %0, %11 : vector<1x128xi32>
    %13 = arith.select %12, %10, %3 : vector<1x128xi1>, vector<1x128xf32>
    %c1_i32 = arith.constant 1 : i32
    %14 = arith.index_cast %c1_i32 : i32 to index
    %c0_7 = arith.constant 0 : index
    %c0_8 = arith.constant 0 : index
    %15 = vector.load %arg2[%14, %c0_7, %c0_8] : memref<8x1x128xf32, #tpu.memory_space<vmem>>, vector<1x1x128xf32>
    %16 = vector.shape_cast %15 : vector<1x1x128xf32> to vector<1x128xf32>
    %17 = arith.truncf %10 : vector<1x128xf32> to vector<1x128xbf16>
    %cst_9 = arith.constant dense<0.000000e+00> : vector<1x128xf32>
    %18 = tpu.matmul %17, %1, %cst_9 {dimension_numbers = #tpu.dot_dimension_numbers<[1], [0], [0], [1], [0, 0, 1, 1], [], []>} : vector<1x128xbf16>, vector<128x128xbf16>, vector<1x128xf32> -> vector<1x128xf32>
    %19 = arith.addf %16, %18 : vector<1x128xf32>
    %20 = math.tanh %19 : vector<1x128xf32>
    %21 = vector.broadcast %c1_i32 : i32 to vector<1x128xi32>
    %22 = arith.cmpi eq, %0, %21 : vector<1x128xi32>
    %23 = arith.select %22, %20, %13 : vector<1x128xi1>, vector<1x128xf32>
    %c2_i32 = arith.constant 2 : i32
    %24 = arith.index_cast %c2_i32 : i32 to index
    %c0_10 = arith.constant 0 : index
    %c0_11 = arith.constant 0 : index
    %25 = vector.load %arg2[%24, %c0_10, %c0_11] : memref<8x1x128xf32, #tpu.memory_space<vmem>>, vector<1x1x128xf32>
    %26 = vector.shape_cast %25 : vector<1x1x128xf32> to vector<1x128xf32>
    %27 = arith.truncf %20 : vector<1x128xf32> to vector<1x128xbf16>
    %cst_12 = arith.constant dense<0.000000e+00> : vector<1x128xf32>
    %28 = tpu.matmul %27, %1, %cst_12 {dimension_numbers = #tpu.dot_dimension_numbers<[1], [0], [0], [1], [0, 0, 1, 1], [], []>} : vector<1x128xbf16>, vector<128x128xbf16>, vector<1x128xf32> -> vector<1x128xf32>
    %29 = arith.addf %26, %28 : vector<1x128xf32>
    %30 = math.tanh %29 : vector<1x128xf32>
    %31 = vector.broadcast %c2_i32 : i32 to vector<1x128xi32>
    %32 = arith.cmpi eq, %0, %31 : vector<1x128xi32>
    %33 = arith.select %32, %30, %23 : vector<1x128xi1>, vector<1x128xf32>
    %c3_i32 = arith.constant 3 : i32
    %34 = arith.index_cast %c3_i32 : i32 to index
    %c0_13 = arith.constant 0 : index
    %c0_14 = arith.constant 0 : index
    %35 = vector.load %arg2[%34, %c0_13, %c0_14] : memref<8x1x128xf32, #tpu.memory_space<vmem>>, vector<1x1x128xf32>
    %36 = vector.shape_cast %35 : vector<1x1x128xf32> to vector<1x128xf32>
    %37 = arith.truncf %30 : vector<1x128xf32> to vector<1x128xbf16>
    %cst_15 = arith.constant dense<0.000000e+00> : vector<1x128xf32>
    %38 = tpu.matmul %37, %1, %cst_15 {dimension_numbers = #tpu.dot_dimension_numbers<[1], [0], [0], [1], [0, 0, 1, 1], [], []>} : vector<1x128xbf16>, vector<128x128xbf16>, vector<1x128xf32> -> vector<1x128xf32>
    %39 = arith.addf %36, %38 : vector<1x128xf32>
    %40 = math.tanh %39 : vector<1x128xf32>
    %41 = vector.broadcast %c3_i32 : i32 to vector<1x128xi32>
    %42 = arith.cmpi eq, %0, %41 : vector<1x128xi32>
    %43 = arith.select %42, %40, %33 : vector<1x128xi1>, vector<1x128xf32>
    %c4_i32 = arith.constant 4 : i32
    %44 = arith.index_cast %c4_i32 : i32 to index
    %c0_16 = arith.constant 0 : index
    %c0_17 = arith.constant 0 : index
    %45 = vector.load %arg2[%44, %c0_16, %c0_17] : memref<8x1x128xf32, #tpu.memory_space<vmem>>, vector<1x1x128xf32>
    %46 = vector.shape_cast %45 : vector<1x1x128xf32> to vector<1x128xf32>
    %47 = arith.truncf %40 : vector<1x128xf32> to vector<1x128xbf16>
    %cst_18 = arith.constant dense<0.000000e+00> : vector<1x128xf32>
    %48 = tpu.matmul %47, %1, %cst_18 {dimension_numbers = #tpu.dot_dimension_numbers<[1], [0], [0], [1], [0, 0, 1, 1], [], []>} : vector<1x128xbf16>, vector<128x128xbf16>, vector<1x128xf32> -> vector<1x128xf32>
    %49 = arith.addf %46, %48 : vector<1x128xf32>
    %50 = math.tanh %49 : vector<1x128xf32>
    %51 = vector.broadcast %c4_i32 : i32 to vector<1x128xi32>
    %52 = arith.cmpi eq, %0, %51 : vector<1x128xi32>
    %53 = arith.select %52, %50, %43 : vector<1x128xi1>, vector<1x128xf32>
    %c5_i32 = arith.constant 5 : i32
    %54 = arith.index_cast %c5_i32 : i32 to index
    %c0_19 = arith.constant 0 : index
    %c0_20 = arith.constant 0 : index
    %55 = vector.load %arg2[%54, %c0_19, %c0_20] : memref<8x1x128xf32, #tpu.memory_space<vmem>>, vector<1x1x128xf32>
    %56 = vector.shape_cast %55 : vector<1x1x128xf32> to vector<1x128xf32>
    %57 = arith.truncf %50 : vector<1x128xf32> to vector<1x128xbf16>
    %cst_21 = arith.constant dense<0.000000e+00> : vector<1x128xf32>
    %58 = tpu.matmul %57, %1, %cst_21 {dimension_numbers = #tpu.dot_dimension_numbers<[1], [0], [0], [1], [0, 0, 1, 1], [], []>} : vector<1x128xbf16>, vector<128x128xbf16>, vector<1x128xf32> -> vector<1x128xf32>
    %59 = arith.addf %56, %58 : vector<1x128xf32>
    %60 = math.tanh %59 : vector<1x128xf32>
    %61 = vector.broadcast %c5_i32 : i32 to vector<1x128xi32>
    %62 = arith.cmpi eq, %0, %61 : vector<1x128xi32>
    %63 = arith.select %62, %60, %53 : vector<1x128xi1>, vector<1x128xf32>
    %c6_i32 = arith.constant 6 : i32
    %64 = arith.index_cast %c6_i32 : i32 to index
    %c0_22 = arith.constant 0 : index
    %c0_23 = arith.constant 0 : index
    %65 = vector.load %arg2[%64, %c0_22, %c0_23] : memref<8x1x128xf32, #tpu.memory_space<vmem>>, vector<1x1x128xf32>
    %66 = vector.shape_cast %65 : vector<1x1x128xf32> to vector<1x128xf32>
    %67 = arith.truncf %60 : vector<1x128xf32> to vector<1x128xbf16>
    %cst_24 = arith.constant dense<0.000000e+00> : vector<1x128xf32>
    %68 = tpu.matmul %67, %1, %cst_24 {dimension_numbers = #tpu.dot_dimension_numbers<[1], [0], [0], [1], [0, 0, 1, 1], [], []>} : vector<1x128xbf16>, vector<128x128xbf16>, vector<1x128xf32> -> vector<1x128xf32>
    %69 = arith.addf %66, %68 : vector<1x128xf32>
    %70 = math.tanh %69 : vector<1x128xf32>
    %71 = vector.broadcast %c6_i32 : i32 to vector<1x128xi32>
    %72 = arith.cmpi eq, %0, %71 : vector<1x128xi32>
    %73 = arith.select %72, %70, %63 : vector<1x128xi1>, vector<1x128xf32>
    %c7_i32 = arith.constant 7 : i32
    %74 = arith.index_cast %c7_i32 : i32 to index
    %c0_25 = arith.constant 0 : index
    %c0_26 = arith.constant 0 : index
    %75 = vector.load %arg2[%74, %c0_25, %c0_26] : memref<8x1x128xf32, #tpu.memory_space<vmem>>, vector<1x1x128xf32>
    %76 = vector.shape_cast %75 : vector<1x1x128xf32> to vector<1x128xf32>
    %77 = arith.truncf %70 : vector<1x128xf32> to vector<1x128xbf16>
    %cst_27 = arith.constant dense<0.000000e+00> : vector<1x128xf32>
    %78 = tpu.matmul %77, %1, %cst_27 {dimension_numbers = #tpu.dot_dimension_numbers<[1], [0], [0], [1], [0, 0, 1, 1], [], []>} : vector<1x128xbf16>, vector<128x128xbf16>, vector<1x128xf32> -> vector<1x128xf32>
    %79 = arith.addf %76, %78 : vector<1x128xf32>
    %80 = math.tanh %79 : vector<1x128xf32>
    %81 = vector.broadcast %c7_i32 : i32 to vector<1x128xi32>
    %82 = arith.cmpi eq, %0, %81 : vector<1x128xi32>
    %83 = arith.select %82, %80, %73 : vector<1x128xi1>, vector<1x128xf32>
    %c8_i32 = arith.constant 8 : i32
    %c0_28 = arith.constant 0 : index
    %c0_29 = arith.constant 0 : index
    %84 = vector.load %arg4[%c0_28, %c0_29] : memref<128x128xbf16, #tpu.memory_space<vmem>>, vector<128x128xbf16>
    %85 = arith.truncf %83 : vector<1x128xf32> to vector<1x128xbf16>
    %cst_30 = arith.constant dense<0.000000e+00> : vector<1x128xf32>
    %86 = tpu.matmul %85, %84, %cst_30 {dimension_numbers = #tpu.dot_dimension_numbers<[1], [0], [0], [1], [0, 0, 1, 1], [], []>} : vector<1x128xbf16>, vector<128x128xbf16>, vector<1x128xf32> -> vector<1x128xf32>
    %c0_31 = arith.constant 0 : index
    %c0_32 = arith.constant 0 : index
    %87 = vector.load %arg5[%c0_31, %c0_32] : memref<1x128xf32, #tpu.memory_space<vmem>>, vector<1x128xf32>
    %88 = arith.addf %86, %87 : vector<1x128xf32>
    %cst_33 = arith.constant 0.000000e+00 : f32
    %89 = vector.broadcast %cst_33 : f32 to vector<1x128xf32>
    %90 = arith.maximumf %88, %89 : vector<1x128xf32>
    %c0_34 = arith.constant 0 : index
    %c0_35 = arith.constant 0 : index
    %91 = vector.load %arg6[%c0_34, %c0_35] : memref<128x512xbf16, #tpu.memory_space<vmem>>, vector<128x512xbf16>
    %92 = arith.truncf %90 : vector<1x128xf32> to vector<1x128xbf16>
    %cst_36 = arith.constant dense<0.000000e+00> : vector<1x512xf32>
    %93 = tpu.matmul %92, %91, %cst_36 {dimension_numbers = #tpu.dot_dimension_numbers<[1], [0], [0], [1], [0, 0, 1, 1], [], []>} : vector<1x128xbf16>, vector<128x512xbf16>, vector<1x512xf32> -> vector<1x512xf32>
    %c0_37 = arith.constant 0 : index
    %c0_38 = arith.constant 0 : index
    %94 = vector.load %arg7[%c0_37, %c0_38] : memref<1x512xf32, #tpu.memory_space<vmem>>, vector<1x512xf32>
    %95 = arith.addf %93, %94 : vector<1x512xf32>
    %c0_39 = arith.constant 0 : index
    %c0_40 = arith.constant 0 : index
    %96 = vector.load %arg8[%c0_39, %c0_40] : memref<1x512xf32, #tpu.memory_space<vmem>>, vector<1x512xf32>
    tpu.vector_store %arg8[%c0_39, %c0_40], %95 {strides = array<i32>} : memref<1x512xf32, #tpu.memory_space<vmem>>, vector<1x512xf32>,
    return
  }
  func.func @transform_0(%arg0: i32) -> (i32, i32) {
    %c0_i32 = arith.constant 0 : i32
    %c0_i32_0 = arith.constant 0 : i32
    return %arg0, %c0_i32 : i32, i32
  }
  func.func @transform_1(%arg0: i32) -> (i32, i32, i32) {
    %c0_i32 = arith.constant 0 : i32
    %c0_i32_0 = arith.constant 0 : i32
    %c0_i32_1 = arith.constant 0 : i32
    return %c0_i32, %arg0, %c0_i32_0 : i32, i32, i32
  }
  func.func @transform_2(%arg0: i32) -> (i32, i32) {
    %c0_i32 = arith.constant 0 : i32
    %c0_i32_0 = arith.constant 0 : i32
    %c0_i32_1 = arith.constant 0 : i32
    return %c0_i32, %c0_i32_0 : i32, i32
  }
  func.func @transform_3(%arg0: i32) -> (i32, i32) {
    %c0_i32 = arith.constant 0 : i32
    %c0_i32_0 = arith.constant 0 : i32
    %c0_i32_1 = arith.constant 0 : i32
    return %c0_i32, %c0_i32_0 : i32, i32
  }
  func.func @transform_4(%arg0: i32) -> (i32, i32) {
    %c0_i32 = arith.constant 0 : i32
    %c0_i32_0 = arith.constant 0 : i32
    %c0_i32_1 = arith.constant 0 : i32
    return %c0_i32, %c0_i32_0 : i32, i32
  }
  func.func @transform_5(%arg0: i32) -> (i32, i32) {
    %c0_i32 = arith.constant 0 : i32
    %c0_i32_0 = arith.constant 0 : i32
    %c0_i32_1 = arith.constant 0 : i32
    return %c0_i32, %c0_i32_0 : i32, i32
  }
  func.func @transform_6(%arg0: i32) -> (i32, i32) {
    %c0_i32 = arith.constant 0 : i32
    %c0_i32_0 = arith.constant 0 : i32
    %c0_i32_1 = arith.constant 0 : i32
    return %c0_i32, %c0_i32_0 : i32, i32
  }
  func.func @transform_7(%arg0: i32) -> (i32, i32) {
    %c0_i32 = arith.constant 0 : i32
    %c0_i32_0 = arith.constant 0 : i32
    return %arg0, %c0_i32 : i32, i32
  }
}

</mosaic_0001>

<llo_original>
// kernel: rnn_forward.1
$region0: #{rnn_forward.1}
  #allocation0 [shape = 'u32[]', space=smem, size = 0x4, offset = 0x4, fixed_abs, tag = 'smem constant byte address 0x4 - core index']
  #allocation1 [shape = 'u32[144,128]{1,0:T(1,128)}', space=vmem, size = 0x12000, scoped, tag = 'internal scratch']
  %s0 = inlined_call_operand.vmem [shape: s32[1,128], index: 0, kind: input, shape index: {}]
  %s1 = inlined_call_operand.vmem [shape: f32[8,1,128], index: 1, kind: input, shape index: {}]
  %s2 = inlined_call_operand.vmem [shape: bf16[128,128], index: 2, kind: input, shape index: {}]
  %s3 = inlined_call_operand.vmem [shape: bf16[128,128], index: 3, kind: input, shape index: {}]
  %s4 = inlined_call_operand.vmem [shape: f32[1,128], index: 4, kind: input, shape index: {}]
  %s5 = inlined_call_operand.vmem [shape: bf16[128,512], index: 5, kind: input, shape index: {}]
  %s6 = inlined_call_operand.vmem [shape: f32[1,512], index: 6, kind: input, shape index: {}]
  %s7 = inlined_call_operand.vmem [shape: f32[1,512], index: 7, kind: output, shape index: {}]
  %s8 = sld [smem:[#allocation0]]
  $region38: #{rnn_forward.1} parent=0
    _
  %s10 = ssub.s32 1, %s8
  %s11 = scalar_select 0, %s10, %s8
  // Predicated region
  $region2: #{rnn_forward.1} parent=0 // pred_check
    _
  $region3: #{rnn_forward.1} parent=0 // pred_check_branch
    %13 = sbr.rel (0) target = $region5
  $region4: #{rnn_forward.1} parent=0 // pred_region
    _
  $region5: #{rnn_forward.1} parent=0 // pred_fallthru
    _
  // Predicated region
  $region6: #{rnn_forward.1} parent=0 // pred_check
    _
  $region7: #{rnn_forward.1} parent=0 // pred_check_branch
    %15 = sbr.rel (0) target = $region9
  $region8: #{rnn_forward.1} parent=0 // pred_region
    _
  $region9: #{rnn_forward.1} parent=0 // pred_fallthru
    _
  // Predicated region
  $region10: #{rnn_forward.1} parent=0 // pred_check
    _
  $region11: #{rnn_forward.1} parent=0 // pred_check_branch
    %17 = sbr.rel (0) target = $region13
  $region12: #{rnn_forward.1} parent=0 // pred_region
    _
  $region13: #{rnn_forward.1} parent=0 // pred_fallthru
    _
  // Predicated region
  $region14: #{rnn_forward.1} parent=0 // pred_check
    _
  $region15: #{rnn_forward.1} parent=0 // pred_check_branch
    %19 = sbr.rel (0) target = $region17
  $region16: #{rnn_forward.1} parent=0 // pred_region
    _
  $region17: #{rnn_forward.1} parent=0 // pred_fallthru
    _
  // Predicated region
  $region18: #{rnn_forward.1} parent=0 // pred_check
    _
  $region19: #{rnn_forward.1} parent=0 // pred_check_branch
    %21 = sbr.rel (0) target = $region21
  $region20: #{rnn_forward.1} parent=0 // pred_region
    _
  $region21: #{rnn_forward.1} parent=0 // pred_fallthru
    _
  // Predicated region
  $region22: #{rnn_forward.1} parent=0 // pred_check
    _
  $region23: #{rnn_forward.1} parent=0 // pred_check_branch
    %23 = sbr.rel (0) target = $region25
  $region24: #{rnn_forward.1} parent=0 // pred_region
    _
  $region25: #{rnn_forward.1} parent=0 // pred_fallthru
    _
  // Predicated region
  $region26: #{rnn_forward.1} parent=0 // pred_check
    _
  $region27: #{rnn_forward.1} parent=0 // pred_check_branch
    %25 = sbr.rel (0) target = $region29
  $region28: #{rnn_forward.1} parent=0 // pred_region
    _
  $region29: #{rnn_forward.1} parent=0 // pred_fallthru
    _
  %v27 = vld [vmem:[%s0] sm:$0x1]
  %v28 = vld [vmem:[%s2] sm:$0xf]
  %v29 = vld [vmem:[%s2 + $0x4] sm:$0xf]
  %v30 = vld [vmem:[%s2 + $0x8] sm:$0xf]
  %v31 = vld [vmem:[%s2 + $0xc] sm:$0xf]
  %v32 = vld [vmem:[%s2 + $0x10] sm:$0xf]
  %v33 = vld [vmem:[%s2 + $0x14] sm:$0xf]
  %v34 = vld [vmem:[%s2 + $0x18] sm:$0xf]
  %v35 = vld [vmem:[%s2 + $0x1c] sm:$0xf]
  %v36 = vld [vmem:[%s2 + $0x20] sm:$0xf]
  %v37 = vld [vmem:[%s2 + $0x24] sm:$0xf]
  %v38 = vld [vmem:[%s2 + $0x28] sm:$0xf]
  %v39 = vld [vmem:[%s2 + $0x2c] sm:$0xf]
  %v40 = vld [vmem:[%s2 + $0x30] sm:$0xf]
  %v41 = vld [vmem:[%s2 + $0x34] sm:$0xf]
  %v42 = vld [vmem:[%s2 + $0x38] sm:$0xf]
  %v43 = vld [vmem:[%s2 + $0x3c] sm:$0xf]
  %v44 = vld [vmem:[%s1] sm:$0x1]
  %v61 = vunpack.c.l.b16 %v28
  %v62 = vunpack.c.l.b16 %v29
  %v63 = vunpack.c.l.b16 %v30
  %v64 = vunpack.c.l.b16 %v31
  %v65 = vunpack.c.l.b16 %v32
  %v66 = vunpack.c.l.b16 %v33
  %v67 = vunpack.c.l.b16 %v34
  %v68 = vunpack.c.l.b16 %v35
  %v69 = vunpack.c.l.b16 %v36
  %v70 = vunpack.c.l.b16 %v37
  %v71 = vunpack.c.l.b16 %v38
  %v72 = vunpack.c.l.b16 %v39
  %v73 = vunpack.c.l.b16 %v40
  %v74 = vunpack.c.l.b16 %v41
  %v75 = vunpack.c.l.b16 %v42
  %v76 = vunpack.c.l.b16 %v43
  %v77 = vpack.c.b16 %v62, %v61
  %v78 = vpack.c.b16 %v64, %v63
  %v79 = vpack.c.b16 %v66, %v65
  %v80 = vpack.c.b16 %v68, %v67
  %v81 = vpack.c.b16 %v70, %v69
  %v82 = vpack.c.b16 %v72, %v71
  %v83 = vpack.c.b16 %v74, %v73
  %v84 = vpack.c.b16 %v76, %v75
  %93 = vmatprep.subr.bf16.mxu0 0
  %94 = vmatpush1.bf16.msra.mxu0 %v77
  %95 = vmatprep.subr.bf16.mxu0 0
  %96 = vmatpush1.bf16.msra.mxu0 %v78
  %97 = vmatprep.subr.bf16.mxu0 0
  %98 = vmatpush1.bf16.msra.mxu0 %v79
  %99 = vmatprep.subr.bf16.mxu0 0
  %100 = vmatpush1.bf16.msra.mxu0 %v80
  %101 = vmatprep.subr.bf16.mxu0 0
  %102 = vmatpush1.bf16.msra.mxu0 %v81
  %103 = vmatprep.subr.bf16.mxu0 0
  %104 = vmatpush1.bf16.msra.mxu0 %v82
  %105 = vmatprep.subr.bf16.mxu0 0
  %106 = vmatpush1.bf16.msra.mxu0 %v83
  %107 = vmatprep.subr.bf16.mxu0 0
  %108 = vmatpush1.bf16.msra.mxu0 %v84
  %109 = vmatprep.subr.bf16.mxu0 0
  %110 = vmatpush1.bf16.msra.mxu0 0
  %111 = vmatprep.subr.bf16.mxu0 0
  %112 = vmatpush1.bf16.msra.mxu0 0
  %113 = vmatprep.subr.bf16.mxu0 0
  %114 = vmatpush1.bf16.msra.mxu0 0
  %115 = vmatprep.subr.bf16.mxu0 0
  %116 = vmatpush1.bf16.msra.mxu0 0
  %117 = vmatprep.subr.bf16.mxu0 0
  %118 = vmatpush1.bf16.msra.mxu0 0
  %119 = vmatprep.subr.bf16.mxu0 0
  %120 = vmatpush1.bf16.msra.mxu0 0
  %121 = vmatprep.subr.bf16.mxu0 0
  %122 = vmatpush1.bf16.msra.mxu0 0
  %123 = vmatprep.subr.bf16.mxu0 0
  %124 = vmatpush1.bf16.msra.mxu0 0
  %125 = vmatprep.mubr.bf16.mxu0 0
  %126 = vmatmul.mubr.bf16.gmra.mrb[0].mxu0 0
  %v127 = vpop.f32.mrb[0].mxu0
  %v128 = vadd.f32 0.0, %v127
  %v129 = vpop.f32.mrb[0].mxu0
  %v130 = vpop.f32.mrb[0].mxu0
  %v131 = vpop.f32.mrb[0].mxu0
  %132 = vdwg.mxu0
  %v133 = vadd.f32 %v44, %v128
  %v134 = vtanh.pop %v133
  %vm135 = vcmp.eq.s32.totalorder %v27, 0
  %v136 = vsel %vm135, %v134, 0.0
  %s137 = scalar_lea.vmem %s1, 1
  %v138 = vld [vmem:[%s137] sm:$0x1]
  %v139 = vpack.c.bf16 %v134, %v134
  %140 = vmatprep.subr.bf16.mxu0 0
  %141 = vmatpush1.bf16.msra.mxu0 %v77
  %142 = vmatprep.subr.bf16.mxu0 0
  %143 = vmatpush1.bf16.msra.mxu0 %v78
  %144 = vmatprep.subr.bf16.mxu0 0
  %145 = vmatpush1.bf16.msra.mxu0 %v79
  %146 = vmatprep.subr.bf16.mxu0 0
  %147 = vmatpush1.bf16.msra.mxu0 %v80
  %148 = vmatprep.subr.bf16.mxu0 0
  %149 = vmatpush1.bf16.msra.mxu0 %v81
  %150 = vmatprep.subr.bf16.mxu0 0
  %151 = vmatpush1.bf16.msra.mxu0 %v82
  %152 = vmatprep.subr.bf16.mxu0 0
  %153 = vmatpush1.bf16.msra.mxu0 %v83
  %154 = vmatprep.subr.bf16.mxu0 0
  %155 = vmatpush1.bf16.msra.mxu0 %v84
  %156 = vmatprep.subr.bf16.mxu0 0
  %157 = vmatpush1.bf16.msra.mxu0 0
  %158 = vmatprep.subr.bf16.mxu0 0
  %159 = vmatpush1.bf16.msra.mxu0 0
  %160 = vmatprep.subr.bf16.mxu0 0
  %161 = vmatpush1.bf16.msra.mxu0 0
  %162 = vmatprep.subr.bf16.mxu0 0
  %163 = vmatpush1.bf16.msra.mxu0 0
  %164 = vmatprep.subr.bf16.mxu0 0
  %165 = vmatpush1.bf16.msra.mxu0 0
  %166 = vmatprep.subr.bf16.mxu0 0
  %167 = vmatpush1.bf16.msra.mxu0 0
  %168 = vmatprep.subr.bf16.mxu0 0
  %169 = vmatpush1.bf16.msra.mxu0 0
  %170 = vmatprep.subr.bf16.mxu0 0
  %171 = vmatpush1.bf16.msra.mxu0 0
  %172 = vmatprep.mubr.bf16.mxu0 0
  %173 = vmatmul.mubr.bf16.gmra.mrb[0].mxu0 %v139
  %v174 = vpop.f32.mrb[0].mxu0
  %v175 = vadd.f32 0.0, %v174
  %v176 = vpop.f32.mrb[0].mxu0
  %v177 = vpop.f32.mrb[0].mxu0
  %v178 = vpop.f32.mrb[0].mxu0
  %179 = vdwg.mxu0
  %v180 = vadd.f32 %v138, %v175
  %v181 = vtanh.pop %v180
  %vm182 = vcmp.eq.s32.totalorder %v27, 1
  %v183 = vsel %vm182, %v181, %v136
  %s184 = scalar_lea.vmem %s1, 2
  %v185 = vld [vmem:[%s184] sm:$0x1]
  %v186 = vpack.c.bf16 %v181, %v181
  %187 = vmatprep.subr.bf16.mxu0 0
  %188 = vmatpush1.bf16.msra.mxu0 %v77
  %189 = vmatprep.subr.bf16.mxu0 0
  %190 = vmatpush1.bf16.msra.mxu0 %v78
  %191 = vmatprep.subr.bf16.mxu0 0
  %192 = vmatpush1.bf16.msra.mxu0 %v79
  %193 = vmatprep.subr.bf16.mxu0 0
  %194 = vmatpush1.bf16.msra.mxu0 %v80
  %195 = vmatprep.subr.bf16.mxu0 0
  %196 = vmatpush1.bf16.msra.mxu0 %v81
  %197 = vmatprep.subr.bf16.mxu0 0
  %198 = vmatpush1.bf16.msra.mxu0 %v82
  %199 = vmatprep.subr.bf16.mxu0 0
  %200 = vmatpush1.bf16.msra.mxu0 %v83
  %201 = vmatprep.subr.bf16.mxu0 0
  %202 = vmatpush1.bf16.msra.mxu0 %v84
  %203 = vmatprep.subr.bf16.mxu0 0
  %204 = vmatpush1.bf16.msra.mxu0 0
  %205 = vmatprep.subr.bf16.mxu0 0
  %206 = vmatpush1.bf16.msra.mxu0 0
  %207 = vmatprep.subr.bf16.mxu0 0
  %208 = vmatpush1.bf16.msra.mxu0 0
  %209 = vmatprep.subr.bf16.mxu0 0
  %210 = vmatpush1.bf16.msra.mxu0 0
  %211 = vmatprep.subr.bf16.mxu0 0
  %212 = vmatpush1.bf16.msra.mxu0 0
  %213 = vmatprep.subr.bf16.mxu0 0
  %214 = vmatpush1.bf16.msra.mxu0 0
  %215 = vmatprep.subr.bf16.mxu0 0
  %216 = vmatpush1.bf16.msra.mxu0 0
  %217 = vmatprep.subr.bf16.mxu0 0
  %218 = vmatpush1.bf16.msra.mxu0 0
  %219 = vmatprep.mubr.bf16.mxu0 0
  %220 = vmatmul.mubr.bf16.gmra.mrb[0].mxu0 %v186
  %v221 = vpop.f32.mrb[0].mxu0
  %v222 = vadd.f32 0.0, %v221
  %v223 = vpop.f32.mrb[0].mxu0
  %v224 = vpop.f32.mrb[0].mxu0
  %v225 = vpop.f32.mrb[0].mxu0
  %226 = vdwg.mxu0
  %v227 = vadd.f32 %v185, %v222
  %v228 = vtanh.pop %v227
  %vm229 = vcmp.eq.s32.totalorder %v27, 2
  %v230 = vsel %vm229, %v228, %v183
  %s231 = scalar_lea.vmem %s1, 3
  %v232 = vld [vmem:[%s231] sm:$0x1]
  %v233 = vpack.c.bf16 %v228, %v228
  %234 = vmatprep.subr.bf16.mxu0 0
  %235 = vmatpush1.bf16.msra.mxu0 %v77
  %236 = vmatprep.subr.bf16.mxu0 0
  %237 = vmatpush1.bf16.msra.mxu0 %v78
  %238 = vmatprep.subr.bf16.mxu0 0
  %239 = vmatpush1.bf16.msra.mxu0 %v79
  %240 = vmatprep.subr.bf16.mxu0 0
  %241 = vmatpush1.bf16.msra.mxu0 %v80
  %242 = vmatprep.subr.bf16.mxu0 0
  %243 = vmatpush1.bf16.msra.mxu0 %v81
  %244 = vmatprep.subr.bf16.mxu0 0
  %245 = vmatpush1.bf16.msra.mxu0 %v82
  %246 = vmatprep.subr.bf16.mxu0 0
  %247 = vmatpush1.bf16.msra.mxu0 %v83
  %248 = vmatprep.subr.bf16.mxu0 0
  %249 = vmatpush1.bf16.msra.mxu0 %v84
  %250 = vmatprep.subr.bf16.mxu0 0
  %251 = vmatpush1.bf16.msra.mxu0 0
  %252 = vmatprep.subr.bf16.mxu0 0
  %253 = vmatpush1.bf16.msra.mxu0 0
  %254 = vmatprep.subr.bf16.mxu0 0
  %255 = vmatpush1.bf16.msra.mxu0 0
  %256 = vmatprep.subr.bf16.mxu0 0
  %257 = vmatpush1.bf16.msra.mxu0 0
  %258 = vmatprep.subr.bf16.mxu0 0
  %259 = vmatpush1.bf16.msra.mxu0 0
  %260 = vmatprep.subr.bf16.mxu0 0
  %261 = vmatpush1.bf16.msra.mxu0 0
  %262 = vmatprep.subr.bf16.mxu0 0
  %263 = vmatpush1.bf16.msra.mxu0 0
  %264 = vmatprep.subr.bf16.mxu0 0
  %265 = vmatpush1.bf16.msra.mxu0 0
  %266 = vmatprep.mubr.bf16.mxu0 0
  %267 = vmatmul.mubr.bf16.gmra.mrb[0].mxu0 %v233
  %v268 = vpop.f32.mrb[0].mxu0
  %v269 = vadd.f32 0.0, %v268
  %v270 = vpop.f32.mrb[0].mxu0
  %v271 = vpop.f32.mrb[0].mxu0
  %v272 = vpop.f32.mrb[0].mxu0
  %273 = vdwg.mxu0
  %v274 = vadd.f32 %v232, %v269
  %v275 = vtanh.pop %v274
  %vm276 = vcmp.eq.s32.totalorder %v27, 3
  %v277 = vsel %vm276, %v275, %v230
  %s278 = scalar_lea.vmem %s1, 4
  %v279 = vld [vmem:[%s278] sm:$0x1]
  %v280 = vpack.c.bf16 %v275, %v275
  %281 = vmatprep.subr.bf16.mxu0 0
  %282 = vmatpush1.bf16.msra.mxu0 %v77
  %283 = vmatprep.subr.bf16.mxu0 0
  %284 = vmatpush1.bf16.msra.mxu0 %v78
  %285 = vmatprep.subr.bf16.mxu0 0
  %286 = vmatpush1.bf16.msra.mxu0 %v79
  %287 = vmatprep.subr.bf16.mxu0 0
  %288 = vmatpush1.bf16.msra.mxu0 %v80
  %289 = vmatprep.subr.bf16.mxu0 0
  %290 = vmatpush1.bf16.msra.mxu0 %v81
  %291 = vmatprep.subr.bf16.mxu0 0
  %292 = vmatpush1.bf16.msra.mxu0 %v82
  %293 = vmatprep.subr.bf16.mxu0 0
  %294 = vmatpush1.bf16.msra.mxu0 %v83
  %295 = vmatprep.subr.bf16.mxu0 0
  %296 = vmatpush1.bf16.msra.mxu0 %v84
  %297 = vmatprep.subr.bf16.mxu0 0
  %298 = vmatpush1.bf16.msra.mxu0 0
  %299 = vmatprep.subr.bf16.mxu0 0
  %300 = vmatpush1.bf16.msra.mxu0 0
  %301 = vmatprep.subr.bf16.mxu0 0
  %302 = vmatpush1.bf16.msra.mxu0 0
  %303 = vmatprep.subr.bf16.mxu0 0
  %304 = vmatpush1.bf16.msra.mxu0 0
  %305 = vmatprep.subr.bf16.mxu0 0
  %306 = vmatpush1.bf16.msra.mxu0 0
  %307 = vmatprep.subr.bf16.mxu0 0
  %308 = vmatpush1.bf16.msra.mxu0 0
  %309 = vmatprep.subr.bf16.mxu0 0
  %310 = vmatpush1.bf16.msra.mxu0 0
  %311 = vmatprep.subr.bf16.mxu0 0
  %312 = vmatpush1.bf16.msra.mxu0 0
  %313 = vmatprep.mubr.bf16.mxu0 0
  %314 = vmatmul.mubr.bf16.gmra.mrb[0].mxu0 %v280
  %v315 = vpop.f32.mrb[0].mxu0
  %v316 = vadd.f32 0.0, %v315
  %v317 = vpop.f32.mrb[0].mxu0
  %v318 = vpop.f32.mrb[0].mxu0
  %v319 = vpop.f32.mrb[0].mxu0
  %320 = vdwg.mxu0
  %v321 = vadd.f32 %v279, %v316
  %v322 = vtanh.pop %v321
  %vm323 = vcmp.eq.s32.totalorder %v27, 4
  %v324 = vsel %vm323, %v322, %v277
  %s325 = scalar_lea.vmem %s1, 5
  %v326 = vld [vmem:[%s325] sm:$0x1]
  %v327 = vpack.c.bf16 %v322, %v322
  %328 = vmatprep.subr.bf16.mxu0 0
  %329 = vmatpush1.bf16.msra.mxu0 %v77
  %330 = vmatprep.subr.bf16.mxu0 0
  %331 = vmatpush1.bf16.msra.mxu0 %v78
  %332 = vmatprep.subr.bf16.mxu0 0
  %333 = vmatpush1.bf16.msra.mxu0 %v79
  %334 = vmatprep.subr.bf16.mxu0 0
  %335 = vmatpush1.bf16.msra.mxu0 %v80
  %336 = vmatprep.subr.bf16.mxu0 0
  %337 = vmatpush1.bf16.msra.mxu0 %v81
  %338 = vmatprep.subr.bf16.mxu0 0
  %339 = vmatpush1.bf16.msra.mxu0 %v82
  %340 = vmatprep.subr.bf16.mxu0 0
  %341 = vmatpush1.bf16.msra.mxu0 %v83
  %342 = vmatprep.subr.bf16.mxu0 0
  %343 = vmatpush1.bf16.msra.mxu0 %v84
  %344 = vmatprep.subr.bf16.mxu0 0
  %345 = vmatpush1.bf16.msra.mxu0 0
  %346 = vmatprep.subr.bf16.mxu0 0
  %347 = vmatpush1.bf16.msra.mxu0 0
  %348 = vmatprep.subr.bf16.mxu0 0
  %349 = vmatpush1.bf16.msra.mxu0 0
  %350 = vmatprep.subr.bf16.mxu0 0
  %351 = vmatpush1.bf16.msra.mxu0 0
  %352 = vmatprep.subr.bf16.mxu0 0
  %353 = vmatpush1.bf16.msra.mxu0 0
  %354 = vmatprep.subr.bf16.mxu0 0
  %355 = vmatpush1.bf16.msra.mxu0 0
  %356 = vmatprep.subr.bf16.mxu0 0
  %357 = vmatpush1.bf16.msra.mxu0 0
  %358 = vmatprep.subr.bf16.mxu0 0
  %359 = vmatpush1.bf16.msra.mxu0 0
  %360 = vmatprep.mubr.bf16.mxu0 0
  %361 = vmatmul.mubr.bf16.gmra.mrb[0].mxu0 %v327
  %v362 = vpop.f32.mrb[0].mxu0
  %v363 = vadd.f32 0.0, %v362
  %v364 = vpop.f32.mrb[0].mxu0
  %v365 = vpop.f32.mrb[0].mxu0
  %v366 = vpop.f32.mrb[0].mxu0
  %367 = vdwg.mxu0
  %v368 = vadd.f32 %v326, %v363
  %v369 = vtanh.pop %v368
  %vm370 = vcmp.eq.s32.totalorder %v27, 5
  %v371 = vsel %vm370, %v369, %v324
  %s372 = scalar_lea.vmem %s1, 6
  %v373 = vld [vmem:[%s372] sm:$0x1]
  %v374 = vpack.c.bf16 %v369, %v369
  %375 = vmatprep.subr.bf16.mxu0 0
  %376 = vmatpush1.bf16.msra.mxu0 %v77
  %377 = vmatprep.subr.bf16.mxu0 0
  %378 = vmatpush1.bf16.msra.mxu0 %v78
  %379 = vmatprep.subr.bf16.mxu0 0
  %380 = vmatpush1.bf16.msra.mxu0 %v79
  %381 = vmatprep.subr.bf16.mxu0 0
  %382 = vmatpush1.bf16.msra.mxu0 %v80
  %383 = vmatprep.subr.bf16.mxu0 0
  %384 = vmatpush1.bf16.msra.mxu0 %v81
  %385 = vmatprep.subr.bf16.mxu0 0
  %386 = vmatpush1.bf16.msra.mxu0 %v82
  %387 = vmatprep.subr.bf16.mxu0 0
  %388 = vmatpush1.bf16.msra.mxu0 %v83
  %389 = vmatprep.subr.bf16.mxu0 0
  %390 = vmatpush1.bf16.msra.mxu0 %v84
  %391 = vmatprep.subr.bf16.mxu0 0
  %392 = vmatpush1.bf16.msra.mxu0 0
  %393 = vmatprep.subr.bf16.mxu0 0
  %394 = vmatpush1.bf16.msra.mxu0 0
  %395 = vmatprep.subr.bf16.mxu0 0
  %396 = vmatpush1.bf16.msra.mxu0 0
  %397 = vmatprep.subr.bf16.mxu0 0
  %398 = vmatpush1.bf16.msra.mxu0 0
  %399 = vmatprep.subr.bf16.mxu0 0
  %400 = vmatpush1.bf16.msra.mxu0 0
  %401 = vmatprep.subr.bf16.mxu0 0
  %402 = vmatpush1.bf16.msra.mxu0 0
  %403 = vmatprep.subr.bf16.mxu0 0
  %404 = vmatpush1.bf16.msra.mxu0 0
  %405 = vmatprep.subr.bf16.mxu0 0
  %406 = vmatpush1.bf16.msra.mxu0 0
  %407 = vmatprep.mubr.bf16.mxu0 0
  %408 = vmatmul.mubr.bf16.gmra.mrb[0].mxu0 %v374
  %v409 = vpop.f32.mrb[0].mxu0
  %v410 = vadd.f32 0.0, %v409
  %v411 = vpop.f32.mrb[0].mxu0
  %v412 = vpop.f32.mrb[0].mxu0
  %v413 = vpop.f32.mrb[0].mxu0
  %414 = vdwg.mxu0
  %v415 = vadd.f32 %v373, %v410
  %v416 = vtanh.pop %v415
  %vm417 = vcmp.eq.s32.totalorder %v27, 6
  %v418 = vsel %vm417, %v416, %v371
  %s419 = scalar_lea.vmem %s1, 7
  %v420 = vld [vmem:[%s419] sm:$0x1]
  %v421 = vpack.c.bf16 %v416, %v416
  %422 = vmatprep.subr.bf16.mxu0 0
  %423 = vmatpush1.bf16.msra.mxu0 %v77
  %424 = vmatprep.subr.bf16.mxu0 0
  %425 = vmatpush1.bf16.msra.mxu0 %v78
  %426 = vmatprep.subr.bf16.mxu0 0
  %427 = vmatpush1.bf16.msra.mxu0 %v79
  %428 = vmatprep.subr.bf16.mxu0 0
  %429 = vmatpush1.bf16.msra.mxu0 %v80
  %430 = vmatprep.subr.bf16.mxu0 0
  %431 = vmatpush1.bf16.msra.mxu0 %v81
  %432 = vmatprep.subr.bf16.mxu0 0
  %433 = vmatpush1.bf16.msra.mxu0 %v82
  %434 = vmatprep.subr.bf16.mxu0 0
  %435 = vmatpush1.bf16.msra.mxu0 %v83
  %436 = vmatprep.subr.bf16.mxu0 0
  %437 = vmatpush1.bf16.msra.mxu0 %v84
  %438 = vmatprep.subr.bf16.mxu0 0
  %439 = vmatpush1.bf16.msra.mxu0 0
  %440 = vmatprep.subr.bf16.mxu0 0
  %441 = vmatpush1.bf16.msra.mxu0 0
  %442 = vmatprep.subr.bf16.mxu0 0
  %443 = vmatpush1.bf16.msra.mxu0 0
  %444 = vmatprep.subr.bf16.mxu0 0
  %445 = vmatpush1.bf16.msra.mxu0 0
  %446 = vmatprep.subr.bf16.mxu0 0
  %447 = vmatpush1.bf16.msra.mxu0 0
  %448 = vmatprep.subr.bf16.mxu0 0
  %449 = vmatpush1.bf16.msra.mxu0 0
  %450 = vmatprep.subr.bf16.mxu0 0
  %451 = vmatpush1.bf16.msra.mxu0 0
  %452 = vmatprep.subr.bf16.mxu0 0
  %453 = vmatpush1.bf16.msra.mxu0 0
  %454 = vmatprep.mubr.bf16.mxu0 0
  %455 = vmatmul.mubr.bf16.gmra.mrb[0].mxu0 %v421
  %v456 = vpop.f32.mrb[0].mxu0
  %v457 = vadd.f32 0.0, %v456
  %v458 = vpop.f32.mrb[0].mxu0
  %v459 = vpop.f32.mrb[0].mxu0
  %v460 = vpop.f32.mrb[0].mxu0
  %461 = vdwg.mxu0
  %v462 = vadd.f32 %v420, %v457
  %v463 = vtanh.pop %v462
  %vm464 = vcmp.eq.s32.totalorder %v27, 7
  %v465 = vsel %vm464, %v463, %v418
  %v466 = vld [vmem:[%s3] sm:$0xf]
  %v467 = vld [vmem:[%s3 + $0x4] sm:$0xf]
  %v468 = vld [vmem:[%s3 + $0x8] sm:$0xf]
  %v469 = vld [vmem:[%s3 + $0xc] sm:$0xf]
  %v470 = vld [vmem:[%s3 + $0x10] sm:$0xf]
  %v471 = vld [vmem:[%s3 + $0x14] sm:$0xf]
  %v472 = vld [vmem:[%s3 + $0x18] sm:$0xf]
  %v473 = vld [vmem:[%s3 + $0x1c] sm:$0xf]
  %v474 = vld [vmem:[%s3 + $0x20] sm:$0xf]
  %v475 = vld [vmem:[%s3 + $0x24] sm:$0xf]
  %v476 = vld [vmem:[%s3 + $0x28] sm:$0xf]
  %v477 = vld [vmem:[%s3 + $0x2c] sm:$0xf]
  %v478 = vld [vmem:[%s3 + $0x30] sm:$0xf]
  %v479 = vld [vmem:[%s3 + $0x34] sm:$0xf]
  %v480 = vld [vmem:[%s3 + $0x38] sm:$0xf]
  %v481 = vld [vmem:[%s3 + $0x3c] sm:$0xf]
  %v482 = vpack.c.bf16 %v465, %v465
  %v483 = vld [vmem:[%s4] sm:$0x1]
  %v500 = vunpack.c.l.b16 %v466
  %v501 = vunpack.c.l.b16 %v467
  %v502 = vunpack.c.l.b16 %v468
  %v503 = vunpack.c.l.b16 %v469
  %v504 = vunpack.c.l.b16 %v470
  %v505 = vunpack.c.l.b16 %v471
  %v506 = vunpack.c.l.b16 %v472
  %v507 = vunpack.c.l.b16 %v473
  %v508 = vunpack.c.l.b16 %v474
  %v509 = vunpack.c.l.b16 %v475
  %v510 = vunpack.c.l.b16 %v476
  %v511 = vunpack.c.l.b16 %v477
  %v512 = vunpack.c.l.b16 %v478
  %v513 = vunpack.c.l.b16 %v479
  %v514 = vunpack.c.l.b16 %v480
  %v515 = vunpack.c.l.b16 %v481
  %v516 = vpack.c.b16 %v501, %v500
  %v517 = vpack.c.b16 %v503, %v502
  %v518 = vpack.c.b16 %v505, %v504
  %v519 = vpack.c.b16 %v507, %v506
  %v520 = vpack.c.b16 %v509, %v508
  %v521 = vpack.c.b16 %v511, %v510
  %v522 = vpack.c.b16 %v513, %v512
  %v523 = vpack.c.b16 %v515, %v514
  %532 = vmatprep.subr.bf16.mxu0 0
  %533 = vmatpush1.bf16.msra.mxu0 %v516
  %534 = vmatprep.subr.bf16.mxu0 0
  %535 = vmatpush1.bf16.msra.mxu0 %v517
  %536 = vmatprep.subr.bf16.mxu0 0
  %537 = vmatpush1.bf16.msra.mxu0 %v518
  %538 = vmatprep.subr.bf16.mxu0 0
  %539 = vmatpush1.bf16.msra.mxu0 %v519
  %540 = vmatprep.subr.bf16.mxu0 0
  %541 = vmatpush1.bf16.msra.mxu0 %v520
  %542 = vmatprep.subr.bf16.mxu0 0
  %543 = vmatpush1.bf16.msra.mxu0 %v521
  %544 = vmatprep.subr.bf16.mxu0 0
  %545 = vmatpush1.bf16.msra.mxu0 %v522
  %546 = vmatprep.subr.bf16.mxu0 0
  %547 = vmatpush1.bf16.msra.mxu0 %v523
  %548 = vmatprep.subr.bf16.mxu0 0
  %549 = vmatpush1.bf16.msra.mxu0 0
  %550 = vmatprep.subr.bf16.mxu0 0
  %551 = vmatpush1.bf16.msra.mxu0 0
  %552 = vmatprep.subr.bf16.mxu0 0
  %553 = vmatpush1.bf16.msra.mxu0 0
  %554 = vmatprep.subr.bf16.mxu0 0
  %555 = vmatpush1.bf16.msra.mxu0 0
  %556 = vmatprep.subr.bf16.mxu0 0
  %557 = vmatpush1.bf16.msra.mxu0 0
  %558 = vmatprep.subr.bf16.mxu0 0
  %559 = vmatpush1.bf16.msra.mxu0 0
  %560 = vmatprep.subr.bf16.mxu0 0
  %561 = vmatpush1.bf16.msra.mxu0 0
  %562 = vmatprep.subr.bf16.mxu0 0
  %563 = vmatpush1.bf16.msra.mxu0 0
  %564 = vmatprep.mubr.bf16.mxu0 0
  %565 = vmatmul.mubr.bf16.gmra.mrb[0].mxu0 %v482
  %v566 = vpop.f32.mrb[0].mxu0
  %v567 = vadd.f32 %v483, %v566
  %v568 = vpop.f32.mrb[0].mxu0
  %v569 = vpop.f32.mrb[0].mxu0
  %v570 = vpop.f32.mrb[0].mxu0
  %571 = vdwg.mxu0
  %v572 = vmax.f32 %v567, 0.0
  %v573 = vld [vmem:[%s5] sm:$0xff]
  %v574 = vld [vmem:[%s5 + $0x8] sm:$0xff]
  %v575 = vld [vmem:[%s5 + $0x10] sm:$0xff]
  %v576 = vld [vmem:[%s5 + $0x18] sm:$0xff]
  %v577 = vld [vmem:[%s5 + $0x20] sm:$0xff]
  %v578 = vld [vmem:[%s5 + $0x28] sm:$0xff]
  %v579 = vld [vmem:[%s5 + $0x30] sm:$0xff]
  %v580 = vld [vmem:[%s5 + $0x38] sm:$0xff]
  %v581 = vld [vmem:[%s5 + $0x40] sm:$0xff]
  %v582 = vld [vmem:[%s5 + $0x48] sm:$0xff]
  %v583 = vld [vmem:[%s5 + $0x50] sm:$0xff]
  %v584 = vld [vmem:[%s5 + $0x58] sm:$0xff]
  %v585 = vld [vmem:[%s5 + $0x60] sm:$0xff]
  %v586 = vld [vmem:[%s5 + $0x68] sm:$0xff]
  %v587 = vld [vmem:[%s5 + $0x70] sm:$0xff]
  %v588 = vld [vmem:[%s5 + $0x78] sm:$0xff]
  %v589 = vld [vmem:[%s5 + $0x80] sm:$0xff]
  %v590 = vld [vmem:[%s5 + $0x88] sm:$0xff]
  %v591 = vld [vmem:[%s5 + $0x90] sm:$0xff]
  %v592 = vld [vmem:[%s5 + $0x98] sm:$0xff]
  %v593 = vld [vmem:[%s5 + $0xa0] sm:$0xff]
  %v594 = vld [vmem:[%s5 + $0xa8] sm:$0xff]
  %v595 = vld [vmem:[%s5 + $0xb0] sm:$0xff]
  %v596 = vld [vmem:[%s5 + $0xb8] sm:$0xff]
  %v597 = vld [vmem:[%s5 + $0xc0] sm:$0xff]
  %v598 = vld [vmem:[%s5 + $0xc8] sm:$0xff]
  %v599 = vld [vmem:[%s5 + $0xd0] sm:$0xff]
  %v600 = vld [vmem:[%s5 + $0xd8] sm:$0xff]
  %v601 = vld [vmem:[%s5 + $0xe0] sm:$0xff]
  %v602 = vld [vmem:[%s5 + $0xe8] sm:$0xff]
  %v603 = vld [vmem:[%s5 + $0xf0] sm:$0xff]
  %v604 = vld [vmem:[%s5 + $0xf8] sm:$0xff]
  %v605 = vpack.c.bf16 %v572, %v572
  %v606 = vld [vmem:[%s6] sm:$0xf]
  %v639 = vunpack.c.l.b16 %v573
  %v640 = vunpack.c.h.b16 %v573
  %v641 = vunpack.c.l.b16 %v574
  %v642 = vunpack.c.h.b16 %v574
  %v643 = vunpack.c.l.b16 %v575
  %v644 = vunpack.c.h.b16 %v575
  %v645 = vunpack.c.l.b16 %v576
  %v646 = vunpack.c.h.b16 %v576
  %v647 = vunpack.c.l.b16 %v577
  %v648 = vunpack.c.h.b16 %v577
  %v649 = vunpack.c.l.b16 %v578
  %v650 = vunpack.c.h.b16 %v578
  %v651 = vunpack.c.l.b16 %v579
  %v652 = vunpack.c.h.b16 %v579
  %v653 = vunpack.c.l.b16 %v580
  %v654 = vunpack.c.h.b16 %v580
  %v655 = vunpack.c.l.b16 %v581
  %v656 = vunpack.c.h.b16 %v581
  %v657 = vunpack.c.l.b16 %v582
  %v658 = vunpack.c.h.b16 %v582
  %v659 = vunpack.c.l.b16 %v583
  %v660 = vunpack.c.h.b16 %v583
  %v661 = vunpack.c.l.b16 %v584
  %v662 = vunpack.c.h.b16 %v584
  %v663 = vunpack.c.l.b16 %v585
  %v664 = vunpack.c.h.b16 %v585
  %v665 = vunpack.c.l.b16 %v586
  %v666 = vunpack.c.h.b16 %v586
  %v667 = vunpack.c.l.b16 %v587
  %v668 = vunpack.c.h.b16 %v587
  %v669 = vunpack.c.l.b16 %v588
  %v670 = vunpack.c.h.b16 %v588
  %v671 = vunpack.c.l.b16 %v589
  %v672 = vunpack.c.h.b16 %v589
  %v673 = vunpack.c.l.b16 %v590
  %v674 = vunpack.c.h.b16 %v590
  %v675 = vunpack.c.l.b16 %v591
  %v676 = vunpack.c.h.b16 %v591
  %v677 = vunpack.c.l.b16 %v592
  %v678 = vunpack.c.h.b16 %v592
  %v679 = vunpack.c.l.b16 %v593
  %v680 = vunpack.c.h.b16 %v593
  %v681 = vunpack.c.l.b16 %v594
  %v682 = vunpack.c.h.b16 %v594
  %v683 = vunpack.c.l.b16 %v595
  %v684 = vunpack.c.h.b16 %v595
  %v685 = vunpack.c.l.b16 %v596
  %v686 = vunpack.c.h.b16 %v596
  %v687 = vunpack.c.l.b16 %v597
  %v688 = vunpack.c.h.b16 %v597
  %v689 = vunpack.c.l.b16 %v598
  %v690 = vunpack.c.h.b16 %v598
  %v691 = vunpack.c.l.b16 %v599
  %v692 = vunpack.c.h.b16 %v599
  %v693 = vunpack.c.l.b16 %v600
  %v694 = vunpack.c.h.b16 %v600
  %v695 = vunpack.c.l.b16 %v601
  %v696 = vunpack.c.h.b16 %v601
  %v697 = vunpack.c.l.b16 %v602
  %v698 = vunpack.c.h.b16 %v602
  %v699 = vunpack.c.l.b16 %v603
  %v700 = vunpack.c.h.b16 %v603
  %v701 = vunpack.c.l.b16 %v604
  %v702 = vunpack.c.h.b16 %v604
  %v703 = vpack.c.b16 %v643, %v639
  %v704 = vpack.c.b16 %v644, %v640
  %v705 = vpack.c.b16 %v645, %v641
  %v706 = vpack.c.b16 %v646, %v642
  %v707 = vpack.c.b16 %v651, %v647
  %v708 = vpack.c.b16 %v652, %v648
  %v709 = vpack.c.b16 %v653, %v649
  %v710 = vpack.c.b16 %v654, %v650
  %v711 = vpack.c.b16 %v659, %v655
  %v712 = vpack.c.b16 %v660, %v656
  %v713 = vpack.c.b16 %v661, %v657
  %v714 = vpack.c.b16 %v662, %v658
  %v715 = vpack.c.b16 %v667, %v663
  %v716 = vpack.c.b16 %v668, %v664
  %v717 = vpack.c.b16 %v669, %v665
  %v718 = vpack.c.b16 %v670, %v666
  %v719 = vpack.c.b16 %v675, %v671
  %v720 = vpack.c.b16 %v676, %v672
  %v721 = vpack.c.b16 %v677, %v673
  %v722 = vpack.c.b16 %v678, %v674
  %v723 = vpack.c.b16 %v683, %v679
  %v724 = vpack.c.b16 %v684, %v680
  %v725 = vpack.c.b16 %v685, %v681
  %v726 = vpack.c.b16 %v686, %v682
  %v727 = vpack.c.b16 %v691, %v687
  %v728 = vpack.c.b16 %v692, %v688
  %v729 = vpack.c.b16 %v693, %v689
  %v730 = vpack.c.b16 %v694, %v690
  %v731 = vpack.c.b16 %v699, %v695
  %v732 = vpack.c.b16 %v700, %v696
  %v733 = vpack.c.b16 %v701, %v697
  %v734 = vpack.c.b16 %v702, %v698
  %v768 = vlaneseq
  %v769 = vshrl.u32 %v768, 7
  %v770 = vsub.s32 0, %v769
  %v771 = vrot.slane %v606, %v770
  %v772 = vlaneseq
  %v773 = vshrl.u32 %v772, 7
  %v774 = vsub.s32 1, %v773
  %v775 = vrot.slane %v606, %v774
  %v776 = vlaneseq
  %v777 = vshrl.u32 %v776, 7
  %v778 = vsub.s32 2, %v777
  %v779 = vrot.slane %v606, %v778
  %v780 = vlaneseq
  %v781 = vshrl.u32 %v780, 7
  %v782 = vsub.s32 3, %v781
  %v783 = vrot.slane %v606, %v782
  %788 = vmatprep.subr.bf16.mxu0 %v704
  %789 = vmatpush1.bf16.msra.mxu0 %v703
  %790 = vmatprep.subr.bf16.mxu0 %v708
  %791 = vmatpush1.bf16.msra.mxu0 %v707
  %792 = vmatprep.subr.bf16.mxu0 %v712
  %793 = vmatpush1.bf16.msra.mxu0 %v711
  %794 = vmatprep.subr.bf16.mxu0 %v716
  %795 = vmatpush1.bf16.msra.mxu0 %v715
  %796 = vmatprep.subr.bf16.mxu0 %v720
  %797 = vmatpush1.bf16.msra.mxu0 %v719
  %798 = vmatprep.subr.bf16.mxu0 %v724
  %799 = vmatpush1.bf16.msra.mxu0 %v723
  %800 = vmatprep.subr.bf16.mxu0 %v728
  %801 = vmatpush1.bf16.msra.mxu0 %v727
  %802 = vmatprep.subr.bf16.mxu0 %v732
  %803 = vmatpush1.bf16.msra.mxu0 %v731
  %804 = vmatprep.subr.bf16.mxu0 0
  %805 = vmatpush1.bf16.msra.mxu0 0
  %806 = vmatprep.subr.bf16.mxu0 0
  %807 = vmatpush1.bf16.msra.mxu0 0
  %808 = vmatprep.subr.bf16.mxu0 0
  %809 = vmatpush1.bf16.msra.mxu0 0
  %810 = vmatprep.subr.bf16.mxu0 0
  %811 = vmatpush1.bf16.msra.mxu0 0
  %812 = vmatprep.subr.bf16.mxu0 0
  %813 = vmatpush1.bf16.msra.mxu0 0
  %814 = vmatprep.subr.bf16.mxu0 0
  %815 = vmatpush1.bf16.msra.mxu0 0
  %816 = vmatprep.subr.bf16.mxu0 0
  %817 = vmatpush1.bf16.msra.mxu0 0
  %818 = vmatprep.subr.bf16.mxu0 0
  %819 = vmatpush1.bf16.msra.mxu0 0
  %820 = vmatprep.mubr.bf16.mxu0 0
  %821 = vmatmul.mubr.bf16.gmra.mrb[0].mxu0 %v605
  %v822 = vpop.f32.mrb[0].mxu0
  %v823 = vadd.f32 %v771, %v822
  %v824 = vpop.f32.mrb[0].mxu0
  %v825 = vadd.f32 %v775, %v824
  %v826 = vpop.f32.mrb[0].mxu0
  %v827 = vpop.f32.mrb[0].mxu0
  %828 = vdwg.mxu0
  %829 = vmatprep.subr.bf16.mxu0 %v706
  %830 = vmatpush1.bf16.msra.mxu0 %v705
  %831 = vmatprep.subr.bf16.mxu0 %v710
  %832 = vmatpush1.bf16.msra.mxu0 %v709
  %833 = vmatprep.subr.bf16.mxu0 %v714
  %834 = vmatpush1.bf16.msra.mxu0 %v713
  %835 = vmatprep.subr.bf16.mxu0 %v718
  %836 = vmatpush1.bf16.msra.mxu0 %v717
  %837 = vmatprep.subr.bf16.mxu0 %v722
  %838 = vmatpush1.bf16.msra.mxu0 %v721
  %839 = vmatprep.subr.bf16.mxu0 %v726
  %840 = vmatpush1.bf16.msra.mxu0 %v725
  %841 = vmatprep.subr.bf16.mxu0 %v730
  %842 = vmatpush1.bf16.msra.mxu0 %v729
  %843 = vmatprep.subr.bf16.mxu0 %v734
  %844 = vmatpush1.bf16.msra.mxu0 %v733
  %845 = vmatprep.subr.bf16.mxu0 0
  %846 = vmatpush1.bf16.msra.mxu0 0
  %847 = vmatprep.subr.bf16.mxu0 0
  %848 = vmatpush1.bf16.msra.mxu0 0
  %849 = vmatprep.subr.bf16.mxu0 0
  %850 = vmatpush1.bf16.msra.mxu0 0
  %851 = vmatprep.subr.bf16.mxu0 0
  %852 = vmatpush1.bf16.msra.mxu0 0
  %853 = vmatprep.subr.bf16.mxu0 0
  %854 = vmatpush1.bf16.msra.mxu0 0
  %855 = vmatprep.subr.bf16.mxu0 0
  %856 = vmatpush1.bf16.msra.mxu0 0
  %857 = vmatprep.subr.bf16.mxu0 0
  %858 = vmatpush1.bf16.msra.mxu0 0
  %859 = vmatprep.subr.bf16.mxu0 0
  %860 = vmatpush1.bf16.msra.mxu0 0
  %861 = vmatprep.mubr.bf16.mxu0 0
  %862 = vmatmul.mubr.bf16.gmra.mrb[0].mxu0 %v605
  %v863 = vpop.f32.mrb[0].mxu0
  %v864 = vadd.f32 %v779, %v863
  %v865 = vpop.f32.mrb[0].mxu0
  %v866 = vadd.f32 %v783, %v865
  %v867 = vpop.f32.mrb[0].mxu0
  %v868 = vpop.f32.mrb[0].mxu0
  %869 = vdwg.mxu0
  %v874 = vcombine.low %v823, %v825
  %v875 = vcombine.low %v864, %v866
  %v877 = vunpack.c.l.s4 1966171168
  %v878 = vunpack.c.0.s8 %v877
  %v879 = vlaneseq
  %v880 = vshrl.u32 %v879, 7
  %v881 = vsub.s32 %v878, %v880
  %v882 = vrot.slane %v874, %v881
  %v884 = vunpack.c.l.s4 1966171168
  %v885 = vunpack.c.0.s8 %v884
  %v886 = vlaneseq
  %v887 = vshrl.u32 %v886, 7
  %v888 = vsub.s32 %v885, %v887
  %v889 = vrot.slane %v875, %v888
  %v890 = vcombine.low %v882, %v889
  %v892 = vunpack.c.l.s4 1966171168
  %v893 = vunpack.c.0.s8 %v892
  %v894 = vlaneseq
  %v895 = vshrl.u32 %v894, 7
  %v896 = vsub.s32 %v893, %v895
  %v897 = vrot.slane %v890, %v896
  %v899 = vlaneseq
  %vm900 = vcmp.ge.s32.totalorder %v899, 0
  %vm901 = vcmp.lt.s32.totalorder %v899, 512
  %vm902 = vmand %vm900, %vm901
  %903 = vst.msk [vmem:[%s7] sm:$0xf] %vm902, %v897
  // Predicated region
  $region30: #{rnn_forward.1} parent=0 // pred_check
    _
  $region31: #{rnn_forward.1} parent=0 // pred_check_branch
    %905 = sbr.rel (0) target = $region33
  $region32: #{rnn_forward.1} parent=0 // pred_region
    _
  $region33: #{rnn_forward.1} parent=0 // pred_fallthru
    _
  // Predicated region
  $region34: #{rnn_forward.1} parent=0 // pred_check
    _
  $region35: #{rnn_forward.1} parent=0 // pred_check_branch
    %907 = sbr.rel (0) target = $region37
  $region36: #{rnn_forward.1} parent=0 // pred_region
    _
  $region37: #{rnn_forward.1} parent=0 // pred_fallthru
    _

</llo_original>
